<compile_context>
chip_gen: v5e
topology: v5e:2x2
jax: 0.10.0
libtpu: 0.0.40
codegen_flags: <defaults>
</compile_context>

<pallas_src>
import math
from functools import partial

import jax
import jax.numpy as jnp
from jax.experimental import pallas as pl
from jax.experimental.pallas import tpu as pltpu

_VMEM_LIMIT = 32 * 1024 * 1024  # <= scoped/physical VMEM on v5e/v6e/v7x


# --------------------------------------------------------------------------
# Padding / tiling helpers
# --------------------------------------------------------------------------

def _round_up(x, m):
    return (x + m - 1) // m * m


def _pad_node_count(n):
    # rows padded so sublane tiles (x8) / lane tiles (x128) divide evenly
    return max(8, _round_up(n, 8)) if n <= 128 else _round_up(n, 128)


def _row_tile(m, pref=256):
    if m <= pref:
        return m
    for t in (pref, 128):
        if m % t == 0:
            return t
    return m


def _spec_tile(m):
    if m <= 512:
        return m
    for t in (512, 256, 128):
        if m % t == 0:
            return t
    return m


def _pad2(x, rows, cols):
    return jnp.pad(x, ((0, rows - x.shape[0]), (0, cols - x.shape[1])))


def _pad_rows_to(x, rows):
    return jnp.pad(x, ((0, rows - x.shape[0]),) + ((0, 0),) * (x.ndim - 1))


def _cp(sem):
    return pltpu.CompilerParams(dimension_semantics=sem,
                                vmem_limit_bytes=_VMEM_LIMIT)


# --------------------------------------------------------------------------
# Pallas kernels
# --------------------------------------------------------------------------

def _linear_kernel(act, has_res, x_ref, w_ref, b_ref, *rest):
    if has_res:
        res_ref, o_ref = rest
    else:
        (o_ref,) = rest
    y = jnp.dot(x_ref[...], w_ref[...], preferred_element_type=jnp.float32)
    y = y + b_ref[...]
    if act == "relu":
        y = jnp.maximum(y, 0.0)
    if has_res:
        y = y + res_ref[...]
    o_ref[...] = y.astype(o_ref.dtype)


def linear(x, w, b, act="none", residual=None):
    """act(x @ w + b) [+ residual]; row tiled, weights resident."""
    M, K = x.shape
    Nout = w.shape[1]
    tm = _row_tile(M)
    in_specs = [pl.BlockSpec((tm, K), lambda i: (i, 0)),
                pl.BlockSpec((K, Nout), lambda i: (0, 0)),
                pl.BlockSpec((1, Nout), lambda i: (0, 0))]
    args = [x, w, b.reshape(1, Nout)]
    if residual is not None:
        in_specs.append(pl.BlockSpec((tm, Nout), lambda i: (i, 0)))
        args.append(residual)
    return pl.pallas_call(
        partial(_linear_kernel, act, residual is not None),
        out_shape=jax.ShapeDtypeStruct((M, Nout), jnp.float32),
        grid=(M // tm,),
        in_specs=in_specs,
        out_specs=pl.BlockSpec((tm, Nout), lambda i: (i, 0)),
        compiler_params=_cp(("parallel",)),
    )(*args)


def _mlp2_kernel(x_ref, w1_ref, b1_ref, w2_ref, b2_ref, o_ref):
    # relu(x @ W1 + b1) @ W2 + b2  (feat_encoder, fused)
    h = jnp.dot(x_ref[...], w1_ref[...], preferred_element_type=jnp.float32)
    h = jnp.maximum(h + b1_ref[...], 0.0)
    y = jnp.dot(h, w2_ref[...], preferred_element_type=jnp.float32) + b2_ref[...]
    o_ref[...] = y.astype(o_ref.dtype)


def mlp2(x, w1, b1, w2, b2):
    M, K = x.shape
    H = w1.shape[1]
    C = w2.shape[1]
    tm = _row_tile(M)
    return pl.pallas_call(
        _mlp2_kernel,
        out_shape=jax.ShapeDtypeStruct((M, C), jnp.float32),
        grid=(M // tm,),
        in_specs=[pl.BlockSpec((tm, K), lambda i: (i, 0)),
                  pl.BlockSpec((K, H), lambda i: (0, 0)),
                  pl.BlockSpec((1, H), lambda i: (0, 0)),
                  pl.BlockSpec((H, C), lambda i: (0, 0)),
                  pl.BlockSpec((1, C), lambda i: (0, 0))],
        out_specs=pl.BlockSpec((tm, C), lambda i: (i, 0)),
        compiler_params=_cp(("parallel",)),
    )(x, w1, b1.reshape(1, H), w2, b2.reshape(1, C))


def _sine_encoding_kernel(ev_ref, div_ref, wev_ref, wsin_ref, wcos_ref, b_ref, o_ref):
    # eignvalue_pos = [ev, sin(100*ev*div), cos(100*ev*div)]; the concat is
    # folded into the linear layer by splitting its weight matrix.
    ev = ev_ref[...]                               # (tm, 1)
    pos = (ev * 100.0) * div_ref[...]              # (tm, H/2)
    y = ev * wev_ref[...]                          # == ev @ W[0:1, :]
    y = y + jnp.dot(jnp.sin(pos), wsin_ref[...], preferred_element_type=jnp.float32)
    y = y + jnp.dot(jnp.cos(pos), wcos_ref[...], preferred_element_type=jnp.float32)
    o_ref[...] = (y + b_ref[...]).astype(o_ref.dtype)


def sine_encoding(ev_col, div_row, w_ev, w_sin, w_cos, bias):
    M = ev_col.shape[0]
    H = w_ev.shape[1]
    half = div_row.shape[1]
    tm = _row_tile(M)
    return pl.pallas_call(
        _sine_encoding_kernel,
        out_shape=jax.ShapeDtypeStruct((M, H), jnp.float32),
        grid=(M // tm,),
        in_specs=[pl.BlockSpec((tm, 1), lambda i: (i, 0)),
                  pl.BlockSpec((1, half), lambda i: (0, 0)),
                  pl.BlockSpec((1, H), lambda i: (0, 0)),
                  pl.BlockSpec((half, H), lambda i: (0, 0)),
                  pl.BlockSpec((half, H), lambda i: (0, 0)),
                  pl.BlockSpec((1, H), lambda i: (0, 0))],
        out_specs=pl.BlockSpec((tm, H), lambda i: (i, 0)),
        compiler_params=_cp(("parallel",)),
    )(ev_col, div_row, w_ev, w_sin, w_cos, bias.reshape(1, H))


def _ln_qkv_kernel(eps, x_ref, g_ref, be_ref, wq_ref, bq_ref, wk_ref, bk_ref,
                   wv_ref, bv_ref, q_ref, k_ref, v_ref):
    # LayerNorm fused with the three attention input projections.
    x = x_ref[...].astype(jnp.float32)
    mu = jnp.mean(x, axis=-1, keepdims=True)
    xc = x - mu
    var = jnp.mean(xc * xc, axis=-1, keepdims=True)
    xn = xc * jax.lax.rsqrt(var + eps) * g_ref[...] + be_ref[...]
    q_ref[...] = (jnp.dot(xn, wq_ref[...], preferred_element_type=jnp.float32)
                  + bq_ref[...]).astype(q_ref.dtype)
    k_ref[...] = (jnp.dot(xn, wk_ref[...], preferred_element_type=jnp.float32)
                  + bk_ref[...]).astype(k_ref.dtype)
    v_ref[...] = (jnp.dot(xn, wv_ref[...], preferred_element_type=jnp.float32)
                  + bv_ref[...]).astype(v_ref.dtype)


def ln_qkv(x, g, b, wq, bq, wk, bk, wv, bv, eps=1e-5):
    M, E = x.shape
    tm = _row_tile(M)
    row = lambda i: (i, 0)
    cst = lambda i: (0, 0)
    return pl.pallas_call(
        partial(_ln_qkv_kernel, eps),
        out_shape=tuple(jax.ShapeDtypeStruct((M, E), jnp.float32) for _ in range(3)),
        grid=(M // tm,),
        in_specs=[pl.BlockSpec((tm, E), row),
                  pl.BlockSpec((1, E), cst), pl.BlockSpec((1, E), cst),
                  pl.BlockSpec((E, E), cst), pl.BlockSpec((1, E), cst),
                  pl.BlockSpec((E, E), cst), pl.BlockSpec((1, E), cst),
                  pl.BlockSpec((E, E), cst), pl.BlockSpec((1, E), cst)],
        out_specs=tuple(pl.BlockSpec((tm, E), row) for _ in range(3)),
        compiler_params=_cp(("parallel",)),
    )(x, g.reshape(1, E), b.reshape(1, E), wq, bq.reshape(1, E),
      wk, bk.reshape(1, E), wv, bv.reshape(1, E))


def _ln_linear_kernel(eps, x_ref, g_ref, be_ref, w_ref, b_ref, o_ref):
    # LayerNorm fused with the following linear (FF1).
    x = x_ref[...].astype(jnp.float32)
    mu = jnp.mean(x, axis=-1, keepdims=True)
    xc = x - mu
    var = jnp.mean(xc * xc, axis=-1, keepdims=True)
    xn = xc * jax.lax.rsqrt(var + eps) * g_ref[...] + be_ref[...]
    y = jnp.dot(xn, w_ref[...], preferred_element_type=jnp.float32) + b_ref[...]
    o_ref[...] = y.astype(o_ref.dtype)


def ln_linear(x, g, b, w, bias, eps=1e-5):
    M, E = x.shape
    Nout = w.shape[1]
    tm = _row_tile(M)
    return pl.pallas_call(
        partial(_ln_linear_kernel, eps),
        out_shape=jax.ShapeDtypeStruct((M, Nout), jnp.float32),
        grid=(M // tm,),
        in_specs=[pl.BlockSpec((tm, E), lambda i: (i, 0)),
                  pl.BlockSpec((1, E), lambda i: (0, 0)),
                  pl.BlockSpec((1, E), lambda i: (0, 0)),
                  pl.BlockSpec((E, Nout), lambda i: (0, 0)),
                  pl.BlockSpec((1, Nout), lambda i: (0, 0))],
        out_specs=pl.BlockSpec((tm, Nout), lambda i: (i, 0)),
        compiler_params=_cp(("parallel",)),
    )(x, g.reshape(1, E), b.reshape(1, E), w, bias.reshape(1, Nout))


def _flash_mha_kernel(nheads, scale, n_valid, tkv,
                      q_ref, k_ref, v_ref, o_ref, m_sc, l_sc, acc_sc):
    kv = pl.program_id(1)

    @pl.when(kv == 0)
    def _init():
        m_sc[...] = jnp.full_like(m_sc, -1e30)
        l_sc[...] = jnp.zeros_like(l_sc)
        acc_sc[...] = jnp.zeros_like(acc_sc)

    q = q_ref[...].astype(jnp.float32)
    k = k_ref[...].astype(jnp.float32)
    v = v_ref[...].astype(jnp.float32)
    tq, E = q.shape
    hd = E // nheads

    # mask out zero-padded key rows (row index >= original N)
    col = kv * tkv + jax.lax.broadcasted_iota(jnp.int32, (tq, tkv), 1)
    key_mask = col < n_valid

    # TODO(synk): batch heads into one contraction when nheads > 1 to avoid
    #             shallow (hd-deep) MXU pushes; nheads==1 is already full-width.
    for h in range(nheads):                       # static, small
        qh = q[:, h * hd:(h + 1) * hd] * scale
        kh = k[:, h * hd:(h + 1) * hd]
        vh = v[:, h * hd:(h + 1) * hd]
        s = jax.lax.dot_general(qh, kh, (((1,), (1,)), ((), ())),
                                preferred_element_type=jnp.float32)
        s = jnp.where(key_mask, s, -1e30)
        m_prev = m_sc[:, h:h + 1]
        m_new = jnp.maximum(m_prev, jnp.max(s, axis=-1, keepdims=True))
        alpha = jnp.exp(m_prev - m_new)
        p = jnp.exp(s - m_new)
        l_sc[:, h:h + 1] = alpha * l_sc[:, h:h + 1] + jnp.sum(p, axis=-1, keepdims=True)
        acc_sc[:, h * hd:(h + 1) * hd] = (
            alpha * acc_sc[:, h * hd:(h + 1) * hd]
            + jnp.dot(p, vh, preferred_element_type=jnp.float32))
        m_sc[:, h:h + 1] = m_new

    @pl.when(kv == pl.num_programs(1) - 1)
    def _finalize():
        acc = acc_sc[...]
        pieces = []
        for h in range(nheads):
            inv = pl.reciprocal(l_sc[:, h:h + 1], approx=True)
            pieces.append(acc[:, h * hd:(h + 1) * hd] * inv)
        out = pieces[0] if nheads == 1 else jnp.concatenate(pieces, axis=-1)
        o_ref[...] = out.astype(o_ref.dtype)


def flash_mha(q, k, v, nheads, n_valid):
    Np, E = q.shape
    hd = E // nheads
    scale = 1.0 / math.sqrt(hd)
    tq = _row_tile(Np)
    tkv = _row_tile(Np)
    return pl.pallas_call(
        partial(_flash_mha_kernel, nheads, scale, n_valid, tkv),
        out_shape=jax.ShapeDtypeStruct((Np, E), jnp.float32),
        grid=(Np // tq, Np // tkv),
        in_specs=[pl.BlockSpec((tq, E), lambda qi, ki: (qi, 0)),
                  pl.BlockSpec((tkv, E), lambda qi, ki: (ki, 0)),
                  pl.BlockSpec((tkv, E), lambda qi, ki: (ki, 0))],
        out_specs=pl.BlockSpec((tq, E), lambda qi, ki: (qi, 0)),
        scratch_shapes=[pltpu.VMEM((tq, nheads), jnp.float32),
                        pltpu.VMEM((tq, nheads), jnp.float32),
                        pltpu.VMEM((tq, E), jnp.float32)],
        compiler_params=_cp(("parallel", "arbitrary")),
    )(q, k, v)


# ---- spectral layer: h' = w0*h + U @ (sum_i s_i * w_{i+1} * (U^T @ h)) ------

def _spectral_t_kernel(nheads, u_ref, h_ref, s_ref, w_ref, t_ref, acc_ref):
    @pl.when(pl.program_id(1) == 0)
    def _init():
        acc_ref[...] = jnp.zeros_like(acc_ref)

    # (U[k_blk, j_blk])^T @ h[k_blk]: contract over the row axis of both,
    # so U is streamed once with no materialized transpose.
    acc_ref[...] += jax.lax.dot_general(
        u_ref[...], h_ref[...], (((0,), (0,)), ((), ())),
        preferred_element_type=jnp.float32)

    @pl.when(pl.program_id(1) == pl.num_programs(1) - 1)
    def _finalize():
        conv = acc_ref[...]
        t = jnp.zeros_like(conv)
        for i in range(nheads):                    # static, small
            t = t + s_ref[:, i:i + 1] * (conv * w_ref[i + 1:i + 2, :])
        t_ref[...] = t.astype(t_ref.dtype)


def spectral_pass_t(u, h, s, w, nheads):
    Np = u.shape[0]
    C = h.shape[1]
    tj = _spec_tile(Np)
    tk = _spec_tile(Np)
    return pl.pallas_call(
        partial(_spectral_t_kernel, nheads),
        out_shape=jax.ShapeDtypeStruct((Np, C), jnp.float32),
        grid=(Np // tj, Np // tk),
        in_specs=[pl.BlockSpec((tk, tj), lambda j, k: (k, j)),
                  pl.BlockSpec((tk, C), lambda j, k: (k, 0)),
                  pl.BlockSpec((tj, s.shape[1]), lambda j, k: (j, 0)),
                  pl.BlockSpec(w.shape, lambda j, k: (0, 0))],
        out_specs=pl.BlockSpec((tj, C), lambda j, k: (j, 0)),
        scratch_shapes=[pltpu.VMEM((tj, C), jnp.float32)],
        compiler_params=_cp(("parallel", "arbitrary")),
    )(u, h, s, w)


def _spectral_out_kernel(u_ref, t_ref, h_ref, w_ref, o_ref, acc_ref):
    @pl.when(pl.program_id(1) == 0)
    def _init():
        acc_ref[...] = w_ref[0:1, :] * h_ref[...]

    acc_ref[...] += jnp.dot(u_ref[...], t_ref[...],
                            preferred_element_type=jnp.float32)

    @pl.when(pl.program_id(1) == pl.num_programs(1) - 1)
    def _finalize():
        o_ref[...] = acc_ref[...].astype(o_ref.dtype)


def spectral_pass_out(u, t, h, w):
    Np = u.shape[0]
    C = h.shape[1]
    ti = _spec_tile(Np)
    tk = _spec_tile(Np)
    return pl.pallas_call(
        _spectral_out_kernel,
        out_shape=jax.ShapeDtypeStruct((Np, C), jnp.float32),
        grid=(Np // ti, Np // tk),
        in_specs=[pl.BlockSpec((ti, tk), lambda i, k: (i, k)),
                  pl.BlockSpec((tk, C), lambda i, k: (k, 0)),
                  pl.BlockSpec((ti, C), lambda i, k: (i, 0)),
                  pl.BlockSpec(w.shape, lambda i, k: (0, 0))],
        out_specs=pl.BlockSpec((ti, C), lambda i, k: (i, 0)),
        scratch_shapes=[pltpu.VMEM((ti, C), jnp.float32)],
        compiler_params=_cp(("parallel", "arbitrary")),
    )(u, t, h, w)


# --------------------------------------------------------------------------
# Glue (plain JAX): exact GELU, params, model driver
# --------------------------------------------------------------------------

def gelu_exact(x):
    # nn.GELU() default is the erf-exact form.
    # TODO(synk): fuse the erf-GELU into the FF1 kernel epilogue once lax.erf
    #             lowering in Mosaic is guaranteed on all targeted TPU gens.
    return 0.5 * x * (1.0 + jax.lax.erf(x * (1.0 / math.sqrt(2.0))))


def init_params(key, nfeat, hidden, nclass, nheads, nlayer):
    ks = jax.random.split(key, 12)

    def lin(k, fan_in, fan_out):
        kw, kb = jax.random.split(k)
        bound = 1.0 / math.sqrt(fan_in)
        w = jax.random.uniform(kw, (fan_in, fan_out), jnp.float32, -bound, bound)
        b = jax.random.uniform(kb, (fan_out,), jnp.float32, -bound, bound)
        return w, b

    p = {}
    # feat_encoder: Linear(nfeat, hidden) -> ReLU -> Linear(hidden, nclass)
    p["fe1_w"], p["fe1_b"] = lin(ks[0], nfeat, hidden)
    p["fe2_w"], p["fe2_b"] = lin(ks[1], hidden, nclass)
    # SineEncoding eig_w: Linear(hidden+1, hidden)
    p["eig_w"], p["eig_b"] = lin(ks[2], hidden + 1, hidden)
    # decoder: Linear(hidden, nheads)
    p["dec_w"], p["dec_b"] = lin(ks[3], hidden, nheads)
    # LayerNorms
    p["mha_ln_g"], p["mha_ln_b"] = jnp.ones((hidden,), jnp.float32), jnp.zeros((hidden,), jnp.float32)
    p["oc_ln_g"], p["oc_ln_b"] = jnp.ones((hidden,), jnp.float32), jnp.zeros((hidden,), jnp.float32)
    # MultiheadAttention projections (stored as (in, out))
    p["wq"], p["bq"] = lin(ks[4], hidden, hidden)
    p["wk"], p["bk"] = lin(ks[5], hidden, hidden)
    p["wv"], p["bv"] = lin(ks[6], hidden, hidden)
    p["wo"], p["bo"] = lin(ks[7], hidden, hidden)
    # FeedForward (oc): Linear(hidden, hidden) -> GELU -> Linear(hidden, hidden)
    p["ff1_w"], p["ff1_b"] = lin(ks[8], hidden, hidden)
    p["ff2_w"], p["ff2_b"] = lin(ks[9], hidden, hidden)
    # FULayer weights (norm='none' -> torch.ones((1, nheads+1, nclass)))
    p["fu_w"] = [jnp.ones((nheads + 1, nclass), jnp.float32) for _ in range(nlayer)]
    return p


def fugnn_forward(params, eignvalue, eignvector, feature, *,
                  hidden, nheads, nlayer):
    N = feature.shape[0]
    nclass = params["fe2_w"].shape[1]
    Np = _pad_node_count(N)              # row padding (masked in attention)
    Cp = _round_up(nclass, 128)          # lane-dense class width
    Sp = _round_up(nheads, 128)          # lane-dense decoder width

    feat_p = _pad_rows_to(feature.astype(jnp.float32), Np)
    ev_p = _pad_rows_to(eignvalue.astype(jnp.float32).reshape(N, 1), Np)
    u_p = _pad2(eignvector.astype(jnp.float32), Np, Np)

    # ---- feat_encoder (norm='none'); dropouts are identity (p=0) -----------
    fe2_w = _pad2(params["fe2_w"], hidden, Cp)
    fe2_b = jnp.pad(params["fe2_b"], (0, Cp - nclass))
    h = mlp2(feat_p, params["fe1_w"], params["fe1_b"], fe2_w, fe2_b)   # (Np, Cp)

    # ---- SineEncoding of eigenvalues ---------------------------------------
    half = hidden // 2
    div = jnp.exp(jnp.arange(0, hidden, 2, dtype=jnp.float32)
                  * (-math.log(10000.0) / hidden)).reshape(1, half)
    w_ev = params["eig_w"][0:1, :]
    w_sin = params["eig_w"][1:1 + half, :]
    w_cos = params["eig_w"][1 + half:, :]
    eig = sine_encoding(ev_p, div, w_ev, w_sin, w_cos, params["eig_b"])  # (Np, H)

    # ---- transformer block: LN+QKV -> flash MHA -> out-proj + residual -----
    q, k, v = ln_qkv(eig, params["mha_ln_g"], params["mha_ln_b"],
                     params["wq"], params["bq"],
                     params["wk"], params["bk"],
                     params["wv"], params["bv"])
    attn = flash_mha(q, k, v, nheads, N)
    eig = linear(attn, params["wo"], params["bo"], residual=eig)

    # ---- transformer block: LN+FF1 -> exact GELU -> FF2 + residual ---------
    ff = ln_linear(eig, params["oc_ln_g"], params["oc_ln_b"],
                   params["ff1_w"], params["ff1_b"])
    ff = gelu_exact(ff)
    eig = linear(ff, params["ff2_w"], params["ff2_b"], residual=eig)

    # ---- decoder (lane-padded) ----------------------------------------------
    dec_w = _pad2(params["dec_w"], hidden, Sp)
    dec_b = jnp.pad(params["dec_b"], (0, Sp - nheads))
    eig_fax = linear(eig, dec_w, dec_b)                                  # (Np, Sp)

    # ---- spectral propagation + FULayer combine ------------------------------
    # TODO(synk): fuse the nlayer loop into a single pallas_call (layer grid
    #             axis) to overlap layer-(l+1) U prefetch with layer-l compute.
    for l in range(nlayer):
        fu_w = jnp.pad(params["fu_w"][l], ((0, 0), (0, Cp - nclass)),
                       constant_values=1.0)
        t = spectral_pass_t(u_p, h, eig_fax, fu_w, nheads)
        h = spectral_pass_out(u_p, t, h, fu_w)

    # norm == 'none' -> return h (strip row / lane padding)
    return h[:N, :nclass]


# --------------------------------------------------------------------------

if __name__ == "__main__":
    N, nfeat, hidden, nclass, nheads, nlayer = 16, 32, 32, 4, 1, 1

    key = jax.random.PRNGKey(0)
    k1, k2, k3, k4 = jax.random.split(key, 4)

    eignvalue = jax.random.uniform(k1, (N,), jnp.float32)                 # (N,)
    q_mat, _ = jnp.linalg.qr(jax.random.normal(k2, (N, N), jnp.float32))
    eignvector = q_mat.astype(jnp.float32)                                # (N, N)
    feature = jax.random.normal(k3, (N, nfeat), jnp.float32)              # (N, nfeat)

    params = init_params(k4, nfeat, hidden, nclass, nheads, nlayer)

    out = fugnn_forward(params, eignvalue, eignvector, feature,
                        hidden=hidden, nheads=nheads, nlayer=nlayer)
    out = jax.block_until_ready(out)
    assert out.shape == (N, nclass) and out.dtype == jnp.float32
    print("KERNEL_OK")
</pallas_src>

<mosaic_0001>
module attributes {stable_mosaic.version = 11 : i64} {
  func.func @_mlp2_kernel(%arg0: i32, %arg1: memref<16x32xf32, #tpu.memory_space<vmem>>, %arg2: memref<32x32xf32, #tpu.memory_space<vmem>>, %arg3: memref<1x32xf32, #tpu.memory_space<vmem>>, %arg4: memref<32x128xf32, #tpu.memory_space<vmem>>, %arg5: memref<1x128xf32, #tpu.memory_space<vmem>>, %arg6: memref<16x128xf32, #tpu.memory_space<vmem>>) attributes {dimension_semantics = [#tpu.dimension_semantics<parallel>], iteration_bounds = array<i64: 1>, scalar_prefetch = 0 : i64, scratch_operands = 0 : i64, tpu.core_type = #tpu.core_type<tc>, window_params = [{transform_indices = @transform_0, window_bounds = array<i64: 16, 32>}, {pipeline_mode = #tpu.pipeline_mode<synchronous>, transform_indices = @transform_1, window_bounds = array<i64: 32, 32>}, {pipeline_mode = #tpu.pipeline_mode<synchronous>, transform_indices = @transform_2, window_bounds = array<i64: 1, 32>}, {pipeline_mode = #tpu.pipeline_mode<synchronous>, transform_indices = @transform_3, window_bounds = array<i64: 32, 128>}, {pipeline_mode = #tpu.pipeline_mode<synchronous>, transform_indices = @transform_4, window_bounds = array<i64: 1, 128>}, {transform_indices = @transform_5, window_bounds = array<i64: 16, 128>}]} {
    %c0 = arith.constant 0 : index
    %c0_0 = arith.constant 0 : index
    %0 = vector.load %arg1[%c0, %c0_0] : memref<16x32xf32, #tpu.memory_space<vmem>>, vector<16x32xf32>
    %c0_1 = arith.constant 0 : index
    %c0_2 = arith.constant 0 : index
    %1 = vector.load %arg2[%c0_1, %c0_2] : memref<32x32xf32, #tpu.memory_space<vmem>>, vector<32x32xf32>
    %cst = arith.constant dense<0.000000e+00> : vector<16x32xf32>
    %2 = tpu.matmul %0, %1, %cst {dimension_numbers = #tpu.dot_dimension_numbers<[1], [0], [0], [1], [0, 0, 1, 1], [], []>} : vector<16x32xf32>, vector<32x32xf32>, vector<16x32xf32> -> vector<16x32xf32>
    %c0_3 = arith.constant 0 : index
    %c0_4 = arith.constant 0 : index
    %3 = vector.load %arg3[%c0_3, %c0_4] : memref<1x32xf32, #tpu.memory_space<vmem>>, vector<1x32xf32>
    %4 = vector.broadcast %3 : vector<1x32xf32> to vector<16x32xf32>
    %5 = arith.addf %2, %4 : vector<16x32xf32>
    %cst_5 = arith.constant 0.000000e+00 : f32
    %6 = vector.broadcast %cst_5 : f32 to vector<16x32xf32>
    %7 = arith.maximumf %5, %6 : vector<16x32xf32>
    %c0_6 = arith.constant 0 : index
    %c0_7 = arith.constant 0 : index
    %8 = vector.load %arg4[%c0_6, %c0_7] : memref<32x128xf32, #tpu.memory_space<vmem>>, vector<32x128xf32>
    %cst_8 = arith.constant dense<0.000000e+00> : vector<16x128xf32>
    %9 = tpu.matmul %7, %8, %cst_8 {dimension_numbers = #tpu.dot_dimension_numbers<[1], [0], [0], [1], [0, 0, 1, 1], [], []>} : vector<16x32xf32>, vector<32x128xf32>, vector<16x128xf32> -> vector<16x128xf32>
    %c0_9 = arith.constant 0 : index
    %c0_10 = arith.constant 0 : index
    %10 = vector.load %arg5[%c0_9, %c0_10] : memref<1x128xf32, #tpu.memory_space<vmem>>, vector<1x128xf32>
    %11 = vector.broadcast %10 : vector<1x128xf32> to vector<16x128xf32>
    %12 = arith.addf %9, %11 : vector<16x128xf32>
    %c0_11 = arith.constant 0 : index
    %c0_12 = arith.constant 0 : index
    %13 = vector.load %arg6[%c0_11, %c0_12] : memref<16x128xf32, #tpu.memory_space<vmem>>, vector<16x128xf32>
    tpu.vector_store %arg6[%c0_11, %c0_12], %12 {strides = array<i32>} : memref<16x128xf32, #tpu.memory_space<vmem>>, vector<16x128xf32>,
    return
  }
  func.func @transform_0(%arg0: i32) -> (i32, i32) {
    %c0_i32 = arith.constant 0 : i32
    %c0_i32_0 = arith.constant 0 : i32
    return %arg0, %c0_i32 : i32, i32
  }
  func.func @transform_1(%arg0: i32) -> (i32, i32) {
    %c0_i32 = arith.constant 0 : i32
    %c0_i32_0 = arith.constant 0 : i32
    %c0_i32_1 = arith.constant 0 : i32
    return %c0_i32, %c0_i32_0 : i32, i32
  }
  func.func @transform_2(%arg0: i32) -> (i32, i32) {
    %c0_i32 = arith.constant 0 : i32
    %c0_i32_0 = arith.constant 0 : i32
    %c0_i32_1 = arith.constant 0 : i32
    return %c0_i32, %c0_i32_0 : i32, i32
  }
  func.func @transform_3(%arg0: i32) -> (i32, i32) {
    %c0_i32 = arith.constant 0 : i32
    %c0_i32_0 = arith.constant 0 : i32
    %c0_i32_1 = arith.constant 0 : i32
    return %c0_i32, %c0_i32_0 : i32, i32
  }
  func.func @transform_4(%arg0: i32) -> (i32, i32) {
    %c0_i32 = arith.constant 0 : i32
    %c0_i32_0 = arith.constant 0 : i32
    %c0_i32_1 = arith.constant 0 : i32
    return %c0_i32, %c0_i32_0 : i32, i32
  }
  func.func @transform_5(%arg0: i32) -> (i32, i32) {
    %c0_i32 = arith.constant 0 : i32
    %c0_i32_0 = arith.constant 0 : i32
    return %arg0, %c0_i32 : i32, i32
  }
}

</mosaic_0001>

<llo_original>
// kernel: tpu_custom_call.1
$region0: #{tpu_custom_call.1}
  #allocation0 [shape = 'u32[]', space=smem, size = 0x4, offset = 0x4, fixed_abs, tag = 'smem constant byte address 0x4 - core index']
  #allocation1 [shape = 'u32[72,128]{1,0:T(1,128)}', space=vmem, size = 0x9000, scoped, tag = 'internal scratch']
  %s0 = inlined_call_operand.hbm [shape: f32[16,32], index: 0, kind: input, shape index: {}]
  %s1 = inlined_call_operand.hbm [shape: f32[32,32], index: 1, kind: input, shape index: {}]
  %s2 = inlined_call_operand.vmem [shape: f32[1,32], index: 2, kind: input, shape index: {}]
  %s3 = inlined_call_operand.hbm [shape: f32[32,128], index: 3, kind: input, shape index: {}]
  %s4 = inlined_call_operand.vmem [shape: f32[1,128], index: 4, kind: input, shape index: {}]
  %s5 = inlined_call_operand.hbm [shape: f32[16,128], index: 5, kind: output, shape index: {}]
  %s6 = sld [smem:[#allocation0]]
  $region42: #{tpu_custom_call.1} parent=0
    _
  %s8 = ssub.s32 1, %s6
  %s9 = scalar_select 0, %s8, %s6
  $region1: #{tpu_custom_call.1} parent=0
    #allocation2 [shape = 'u8[8192]{0}', space=vmem, size = 0x2000, scoped, tag = 'input window, operand 0, single buffered']
    #allocation3 [shape = 's32[1]{0}', space=sflag, size = 0x4, scoped, tag = 'scoped memory for tpu_custom_call.1']
    #allocation4 [shape = 's32[1]{0}', space=sflag, size = 0x4, scoped, tag = 'scoped memory for tpu_custom_call.1']
    #allocation5 [shape = 'u8[16384]{0}', space=vmem, size = 0x4000, scoped, tag = 'input window, operand 1, single buffered']
    #allocation6 [shape = 's32[1]{0}', space=sflag, size = 0x4, scoped, tag = 'scoped memory for tpu_custom_call.1']
    #allocation7 [shape = 'u8[16384]{0}', space=vmem, size = 0x4000, scoped, tag = 'input window, operand 3, single buffered']
    #allocation8 [shape = 'u8[8192]{0}', space=vmem, size = 0x2000, scoped, tag = 'output window, operand 0, single buffered']
    %10 = vsyncpa [#allocation3], 0
    %11 = vsyncpa [#allocation6], 0
    %12 = vsyncpa [#allocation4], 0
    // Predicated region
    $region2: #{tpu_custom_call.1} parent=1 // pred_check
      _
    $region3: #{tpu_custom_call.1} parent=1 // pred_check_branch
      %14 = sbr.rel (0) target = $region5
    $region4: #{tpu_custom_call.1} parent=1 // pred_region
      %16 = vsyncadd [#allocation3], 0
      %s17 = sshll.u32 %s0, 4
      %s18 = int_to_ptr.hbm [resolvable:$true] %s17
      %s19 = sshll.u32 [#allocation2], 4
      %s20 = int_to_ptr.vmem [resolvable:$true] %s19
      %25 = dma.hbm_to_vmem [thread:$0]  %s18, 256, %s20, [#allocation3], 128, 128, 8
    $region5: #{tpu_custom_call.1} parent=1 // pred_fallthru
      _
    // Predicated region
    $region6: #{tpu_custom_call.1} parent=1 // pred_check
      _
    $region7: #{tpu_custom_call.1} parent=1 // pred_check_branch
      %27 = sbr.rel (0) target = $region9
    $region8: #{tpu_custom_call.1} parent=1 // pred_region
      %29 = vsyncadd [#allocation6], 0
      %s30 = sshll.u32 %s1, 4
      %s31 = int_to_ptr.hbm [resolvable:$true] %s30
      %s32 = sshll.u32 [#allocation5], 4
      %s33 = int_to_ptr.vmem [resolvable:$true] %s32
      %38 = dma.hbm_to_vmem [thread:$0]  %s31, 512, %s33, [#allocation6], 128, 128, 8
    $region9: #{tpu_custom_call.1} parent=1 // pred_fallthru
      _
    // Predicated region
    $region10: #{tpu_custom_call.1} parent=1 // pred_check
      _
    $region11: #{tpu_custom_call.1} parent=1 // pred_check_branch
      %40 = sbr.rel (0) target = $region13
    $region12: #{tpu_custom_call.1} parent=1 // pred_region
      _
    $region13: #{tpu_custom_call.1} parent=1 // pred_fallthru
      _
    // Predicated region
    $region14: #{tpu_custom_call.1} parent=1 // pred_check
      _
    $region15: #{tpu_custom_call.1} parent=1 // pred_check_branch
      %42 = sbr.rel (0) target = $region17
    $region16: #{tpu_custom_call.1} parent=1 // pred_region
      %44 = vsyncadd [#allocation6], 0
      %s45 = sshll.u32 %s3, 4
      %s46 = int_to_ptr.hbm [resolvable:$true] %s45
      %s47 = sshll.u32 [#allocation7], 4
      %s48 = int_to_ptr.vmem [resolvable:$true] %s47
      %53 = dma.hbm_to_vmem [thread:$0]  %s46, 512, %s48, [#allocation6], 128, 128, 8
    $region17: #{tpu_custom_call.1} parent=1 // pred_fallthru
      _
    // Predicated region
    $region18: #{tpu_custom_call.1} parent=1 // pred_check
      _
    $region19: #{tpu_custom_call.1} parent=1 // pred_check_branch
      %55 = sbr.rel (0) target = $region21
    $region20: #{tpu_custom_call.1} parent=1 // pred_region
      _
    $region21: #{tpu_custom_call.1} parent=1 // pred_fallthru
      _
    // Predicated region
    $region22: #{tpu_custom_call.1} parent=1 // pred_check
      _
    $region23: #{tpu_custom_call.1} parent=1 // pred_check_branch
      %57 = sbr.rel (0) target = $region25
    $region24: #{tpu_custom_call.1} parent=1 // pred_region
      %59 = dma.done [#allocation3], 256
    $region25: #{tpu_custom_call.1} parent=1 // pred_fallthru
      _
    // Predicated region
    $region26: #{tpu_custom_call.1} parent=1 // pred_check
      _
    $region27: #{tpu_custom_call.1} parent=1 // pred_check_branch
      %61 = sbr.rel (0) target = $region29
    $region28: #{tpu_custom_call.1} parent=1 // pred_region
      %63 = dma.done [#allocation6], 512
    $region29: #{tpu_custom_call.1} parent=1 // pred_fallthru
      _
    // Predicated region
    $region30: #{tpu_custom_call.1} parent=1 // pred_check
      _
    $region31: #{tpu_custom_call.1} parent=1 // pred_check_branch
      %65 = sbr.rel (0) target = $region33
    $region32: #{tpu_custom_call.1} parent=1 // pred_region
      %67 = dma.done [#allocation6], 512
    $region33: #{tpu_custom_call.1} parent=1 // pred_fallthru
      _
    %v68 = vld [vmem:[#allocation2] sm:$0xff]
    %v69 = vld [vmem:[#allocation2 + $0x8] sm:$0xff]
    %v70 = vld [vmem:[#allocation5] sm:$0xff]
    %v71 = vld [vmem:[#allocation5 + $0x8] sm:$0xff]
    %v72 = vld [vmem:[#allocation5 + $0x10] sm:$0xff]
    %v73 = vld [vmem:[#allocation5 + $0x18] sm:$0xff]
    %v74 = vld [vmem:[%s2] sm:$0x1]
    %v76 = vperm.slane %v74, 0
    %vm78 = vcmask 261120
    %v80 = vsel %vm78, %v68, 0
    %v83 = vsel %vm78, %v69, 0
    %85 = vmatpush.msra.mxu0 0.0
    %86 = vmatpush.msra.mxu0 0.0
    %87 = vmatpush.msra.mxu0 0.0
    %88 = vmatpush.msra.mxu0 0.0
    %89 = vmatpush.msra.mxu0 0.0
    %90 = vmatpush.msra.mxu0 0.0
    %91 = vmatpush.msra.mxu0 0.0
    %92 = vmatpush.msra.mxu0 0.0
    %93 = vmatpush.msra.mxu0 0.0
    %94 = vmatpush.msra.mxu0 0.0
    %95 = vmatpush.msra.mxu0 0.0
    %96 = vmatpush.msra.mxu0 0.0
    %97 = vmatpush.msra.mxu0 %v73
    %98 = vmatpush.msra.mxu0 %v72
    %99 = vmatpush.msra.mxu0 %v71
    %100 = vmatpush.msra.mxu0 %v70
    %101 = vmatmul.f32.gmra.mxu0 %v80
    %v102 = vpop.f32.mrf.mxu0
    %v103 = vadd.f32 %v76, %v102
    %104 = vmatmul.f32.gmra.mxu0 %v83
    %v105 = vpop.f32.mrf.mxu0
    %v106 = vadd.f32 %v76, %v105
    %107 = vdwg.mxu0
    %v108 = vmax.f32 %v103, 0.0
    %v109 = vmax.f32 %v106, 0.0
    %v110 = vld [vmem:[#allocation7] sm:$0xff]
    %v111 = vld [vmem:[#allocation7 + $0x8] sm:$0xff]
    %v112 = vld [vmem:[#allocation7 + $0x10] sm:$0xff]
    %v113 = vld [vmem:[#allocation7 + $0x18] sm:$0xff]
    %v114 = vld [vmem:[%s4] sm:$0x1]
    %v116 = vperm.slane %v114, 0
    %v119 = vsel %vm78, %v108, 0
    %v122 = vsel %vm78, %v109, 0
    %124 = vmatpush.msra.mxu0 0.0
    %125 = vmatpush.msra.mxu0 0.0
    %126 = vmatpush.msra.mxu0 0.0
    %127 = vmatpush.msra.mxu0 0.0
    %128 = vmatpush.msra.mxu0 0.0
    %129 = vmatpush.msra.mxu0 0.0
    %130 = vmatpush.msra.mxu0 0.0
    %131 = vmatpush.msra.mxu0 0.0
    %132 = vmatpush.msra.mxu0 0.0
    %133 = vmatpush.msra.mxu0 0.0
    %134 = vmatpush.msra.mxu0 0.0
    %135 = vmatpush.msra.mxu0 0.0
    %136 = vmatpush.msra.mxu0 %v113
    %137 = vmatpush.msra.mxu0 %v112
    %138 = vmatpush.msra.mxu0 %v111
    %139 = vmatpush.msra.mxu0 %v110
    %140 = vmatmul.f32.gmra.mxu0 %v119
    %v141 = vpop.f32.mrf.mxu0
    %v142 = vadd.f32 %v116, %v141
    %143 = vmatmul.f32.gmra.mxu0 %v122
    %v144 = vpop.f32.mrf.mxu0
    %v145 = vadd.f32 %v116, %v144
    %146 = vdwg.mxu0
    %147 = vst [vmem:[#allocation8] sm:$0xff] %v142
    %148 = vst [vmem:[#allocation8 + $0x8] sm:$0xff] %v145
    // Predicated region
    $region34: #{tpu_custom_call.1} parent=1 // pred_check
      _
    $region35: #{tpu_custom_call.1} parent=1 // pred_check_branch
      %150 = sbr.rel (0) target = $region37
    $region36: #{tpu_custom_call.1} parent=1 // pred_region
      %152 = vsyncadd [#allocation4], 0
      %s153 = sshll.u32 [#allocation8], 4
      %s154 = int_to_ptr.vmem [resolvable:$true] %s153
      %s155 = sshll.u32 %s5, 4
      %s156 = int_to_ptr.hbm [resolvable:$true] %s155
      %161 = dma.vmem_to_hbm [thread:$0]  %s154, 256, %s156, [#allocation4], 128, 128, 8
    $region37: #{tpu_custom_call.1} parent=1 // pred_fallthru
      _
    // Predicated region
    $region38: #{tpu_custom_call.1} parent=1 // pred_check
      _
    $region39: #{tpu_custom_call.1} parent=1 // pred_check_branch
      %163 = sbr.rel (0) target = $region41
    $region40: #{tpu_custom_call.1} parent=1 // pred_region
      %165 = dma.done [#allocation4], 256
    $region41: #{tpu_custom_call.1} parent=1 // pred_fallthru
      _
    %166 = vsyncpa [#allocation3], 1
    %167 = vsyncpa [#allocation6], 1
    %168 = vsyncpa [#allocation4], 1

</llo_original>
